<compile_context>
chip_gen: v6e
topology: v6e:2x2x1
jax: 0.10.0
libtpu: 0.0.40
codegen_flags: <defaults>
</compile_context>

<pallas_src>
import math
import functools

import jax
import jax.numpy as jnp
from jax.experimental import pallas as pl
from jax.experimental.pallas import tpu as pltpu


# ----------------------------------------------------------------------------
# Generation-aware budgets & tile selection
# ----------------------------------------------------------------------------
def _tpu_budgets():
    """(vmem_limit_bytes, target_block_bytes) derived from the actual chip."""
    vmem_cap = 64 << 20  # conservative fallback (v7x per-TC VMEM)
    try:
        info = pltpu.get_tpu_info()
        vmem_cap = int(getattr(info, "vmem_capacity_bytes", vmem_cap))
    except Exception:
        pass
    vmem_limit = int(0.70 * vmem_cap)           # headroom for scratch / overheads
    # Live footprint ≈ (x + attack + out) * double-buffer ≈ 6-8 block-sized refs.
    target_block = int(min(8 << 20, max(2 << 20, vmem_limit // 10)))
    return vmem_limit, target_block


def _sublane_mult(itemsize):
    # sublane packing: f32 -> 8, bf16 -> 16, int8 -> 32
    return max(8, 32 // max(1, itemsize))


def _round_rows_down(rows, mult):
    return max(mult, (rows // mult) * mult)


def _round_rows_up(rows, mult):
    return -(-rows // mult) * mult


def _choose_tiles(S, D, itemsize, target_block_bytes):
    """Pick (TS, TD). Prefer TD = D (contiguous full-row DMA); split D only when a
    full row exceeds the block budget, and then into a multiple-of-128 divisor."""
    mult = _sublane_mult(itemsize)
    row_bytes = D * itemsize
    if row_bytes <= target_block_bytes or D % 128 != 0:
        TD = D  # full extent is always layout-legal (non-128-multiple D kept whole)
    else:
        TD = 128
        for cand in range(D // 128, 0, -1):
            td = cand * 128
            if D % td == 0 and td * itemsize <= target_block_bytes:
                TD = td
                break
    rows = max(1, target_block_bytes // max(1, TD * itemsize))
    if rows >= S:
        TS = _round_rows_up(S, mult)   # single (possibly edge-padded) seq tile
    else:
        TS = _round_rows_down(rows, mult)
    return TS, TD


def _shrink_for_megacore(B, S, D, TS, TD, mult, min_steps=8):
    """Ensure enough parallel grid steps so v7x's two TensorCores both get work."""
    while B * pl.cdiv(S, TS) * pl.cdiv(D, TD) < min_steps and TS > mult:
        TS = max(mult, ((TS // 2) // mult) * mult)
    return TS


# ----------------------------------------------------------------------------
# Kernels
# ----------------------------------------------------------------------------
def _masked_add_kernel(x_ref, attack_ref, mask_ref, o_ref):
    # x_ref:      (1, TS, TD)
    # attack_ref: (1, TS, TD)   prefix rows of the full attack (via index_map)
    # mask_ref:   (1, TS, 1)    int32 (0 / 1), lane-broadcast
    x = x_ref[...]
    a = attack_ref[...].astype(x.dtype)      # matches PyTorch .to(x.dtype); no-op if same
    m = mask_ref[...] != 0
    o_ref[...] = jnp.where(m, x + a, x)      # exact masked-assignment semantics


def _clip_attack_kernel(attack_ref, o_ref, *, epsilon):
    # attack_ref: (1, TS, D) -> project each row onto the L2 ball of radius eps.
    a = attack_ref[...].astype(jnp.float32)
    sumsq = jnp.sum(a * a, axis=-1, keepdims=True)
    # min(eps * rsqrt(0), 1) == min(inf, 1) == 1, so zero rows need no extra guard.
    # rsqrt goes to the EUP slot (no divide); ~1 ulp from sqrt+div.
    scale = jnp.minimum(epsilon * jax.lax.rsqrt(sumsq), 1.0)
    o_ref[...] = (a * scale).astype(o_ref.dtype)


# ----------------------------------------------------------------------------
# Wrappers
# ----------------------------------------------------------------------------
def clip_attack(attack, epsilon, *, donate=False):
    """Pallas version of GDAdversary.clip_attack() (L2 projection over hidden).

    Set donate=True only when the input buffer is actually donated (e.g. under
    jit with donate_argnums); otherwise XLA inserts a defensive copy.
    """
    B, S, D = attack.shape
    itemsize = attack.dtype.itemsize
    mult = _sublane_mult(itemsize)
    vmem_limit, target_block = _tpu_budgets()

    # The norm reduces over full D, so the block always carries all D columns.
    # Size TS against the *true* block bytes TS*D*itemsize (perf-review fix).
    rows = max(1, target_block // max(1, D * itemsize))
    TS = _round_rows_up(S, mult) if rows >= S else _round_rows_down(rows, mult)
    TS = _shrink_for_megacore(B, S, D, TS, D, mult)
    grid = (B, pl.cdiv(S, TS))

    extra = {"input_output_aliases": {0: 0}} if donate else {}

    return pl.pallas_call(
        functools.partial(_clip_attack_kernel, epsilon=float(epsilon)),
        out_shape=jax.ShapeDtypeStruct((B, S, D), attack.dtype),
        grid_spec=pltpu.PrefetchScalarGridSpec(
            num_scalar_prefetch=0,
            grid=grid,
            in_specs=[pl.BlockSpec((1, TS, D), lambda b, s: (b, s, 0))],
            out_specs=pl.BlockSpec((1, TS, D), lambda b, s: (b, s, 0)),
        ),
        compiler_params=pltpu.CompilerParams(
            dimension_semantics=("parallel", "parallel"),
            vmem_limit_bytes=vmem_limit,
        ),
        **extra,
    )(attack)


def gd_adversary_forward(x, attack, attack_mask, *, alias_x=False,
                         extra_buffering=False):
    """Pallas version of GDAdversary.forward().

    x:           (B, S, D)
    attack:      (B, S_attack, D) with S_attack >= S
    attack_mask: (B, S_attack) bool

    alias_x=True only when the caller donates x (jit donate_argnums); otherwise
    XLA inserts a hidden full copy.  extra_buffering=True requests 3-deep
    pipelining (small v7x win; unnecessary on v5e/v6e).
    """
    B, S, D = x.shape
    if S == 1 and attack.shape[1] != 1:
        # generation-step early exit (no perturbation), same as the PyTorch code
        return x
    if attack.shape[1] < S:
        raise ValueError(
            f"Attack shape {attack.shape} is shorter than input shape {x.shape}")

    # Tiny (B * S_attack * 4 B) reshape; the big attack tensor is NOT sliced or
    # copied -- the BlockSpec index_map reads only its first S rows from HBM.
    mask3 = attack_mask.astype(jnp.int32)[..., None]  # (B, S_attack, 1)

    itemsize = x.dtype.itemsize
    mult = _sublane_mult(itemsize)
    vmem_limit, target_block = _tpu_budgets()
    TS, TD = _choose_tiles(S, D, itemsize, target_block)
    TS = _shrink_for_megacore(B, S, D, TS, TD, mult)
    grid = (B, pl.cdiv(S, TS), pl.cdiv(D, TD))

    pipe = {"pipeline_mode": pl.Buffered(3)} if extra_buffering else {}
    in_specs = [
        pl.BlockSpec((1, TS, TD), lambda b, s, d: (b, s, d), **pipe),  # x
        pl.BlockSpec((1, TS, TD), lambda b, s, d: (b, s, d), **pipe),  # attack prefix
        pl.BlockSpec((1, TS, 1), lambda b, s, d: (b, s, 0)),           # mask prefix
    ]
    out_specs = pl.BlockSpec((1, TS, TD), lambda b, s, d: (b, s, d), **pipe)

    extra = {"input_output_aliases": {0: 0}} if alias_x else {}

    return pl.pallas_call(
        _masked_add_kernel,
        out_shape=jax.ShapeDtypeStruct((B, S, D), x.dtype),
        grid_spec=pltpu.PrefetchScalarGridSpec(
            num_scalar_prefetch=0,
            grid=grid,
            in_specs=in_specs,
            out_specs=out_specs,
        ),
        compiler_params=pltpu.CompilerParams(
            dimension_semantics=("parallel", "parallel", "parallel"),
            vmem_limit_bytes=vmem_limit,
        ),
        **extra,
    )(x, attack, mask3)


# ----------------------------------------------------------------------------
# Deterministic parameter init (mirrors __init__: zeros -> kaiming_uniform_ -> clip)
# ----------------------------------------------------------------------------
def init_gd_adversary(key, batch, seq, dim, epsilon, dtype=jnp.float32):
    # torch.nn.init.kaiming_uniform_ defaults: a=0, mode='fan_in',
    # nonlinearity='leaky_relu' => gain = sqrt(2); for a 3-D tensor (B, S, D),
    # fan_in = size(1) * receptive_field = S * D.
    fan_in = seq * dim
    gain = math.sqrt(2.0)
    bound = gain * math.sqrt(3.0 / fan_in)
    attack = jax.random.uniform(
        key, (batch, seq, dim), dtype=dtype, minval=-bound, maxval=bound)
    attack = clip_attack(attack, epsilon)
    return attack
    # TODO(synk): the PyTorch module also mutates x in-place and migrates the
    # Parameter across devices in forward(); that bookkeeping has no JAX
    # equivalent and is handled functionally here (fresh output, alias optional).


# ----------------------------------------------------------------------------
# Demo / correctness check
# ----------------------------------------------------------------------------
if __name__ == "__main__":
    B, S, D = 2, 8, 128
    S_ATTACK = 12            # attack longer than x's sequence -> exercises prefix read
    epsilon = 0.5

    key = jax.random.PRNGKey(0)
    k_attack, k_x, k_mask = jax.random.split(key, 3)

    attack = init_gd_adversary(k_attack, B, S_ATTACK, D, epsilon)
    x = jax.random.normal(k_x, (B, S, D), dtype=jnp.float32)
    attack_mask = jax.random.bernoulli(k_mask, p=0.5, shape=(B, S_ATTACK))

    out = gd_adversary_forward(x, attack, attack_mask)
    out = jax.block_until_ready(out)

    # Pure-JAX reference of the PyTorch semantics.
    ref = jnp.where(attack_mask[:, :S, None], x + attack[:, :S, :], x)
    assert out.shape == x.shape and out.dtype == x.dtype
    assert jnp.allclose(out, ref, atol=1e-6, rtol=1e-6)

    # Reference check for the clip kernel (row norms must be <= epsilon).
    norms = jnp.linalg.norm(attack, axis=-1)
    assert bool(jnp.all(norms <= epsilon + 1e-5))

    # Generation-step early exit (x.shape[1] == 1, attack longer): returns x.
    x1 = jax.random.normal(k_x, (B, 1, D), dtype=jnp.float32)
    assert gd_adversary_forward(x1, attack, attack_mask) is x1

    print("KERNEL_OK")
</pallas_src>

<mosaic_0001>
module attributes {stable_mosaic.version = 11 : i64} {
  func.func @_clip_attack_kernel(%arg0: i32, %arg1: i32, %arg2: memref<1x8x128xf32, #tpu.memory_space<vmem>>, %arg3: memref<1x8x128xf32, #tpu.memory_space<vmem>>) attributes {dimension_semantics = [#tpu.dimension_semantics<parallel>, #tpu.dimension_semantics<parallel>], iteration_bounds = array<i64: 2, 2>, scalar_prefetch = 0 : i64, scratch_operands = 0 : i64, tpu.core_type = #tpu.core_type<tc>, window_params = [{transform_indices = @transform_0, window_bounds = array<i64: 1, 8, 128>}, {transform_indices = @transform_1, window_bounds = array<i64: 1, 8, 128>}]} {
    %c0 = arith.constant 0 : index
    %c0_0 = arith.constant 0 : index
    %c0_1 = arith.constant 0 : index
    %0 = vector.load %arg2[%c0, %c0_0, %c0_1] : memref<1x8x128xf32, #tpu.memory_space<vmem>>, vector<1x8x128xf32>
    %1 = arith.mulf %0, %0 : vector<1x8x128xf32>
    %cst = arith.constant dense<0.000000e+00> : vector<1x8xf32>
    %2 = vector.multi_reduction <add>, %1, %cst [2] : vector<1x8x128xf32> to vector<1x8xf32>
    %3 = vector.shape_cast %2 : vector<1x8xf32> to vector<1x8x1xf32>
    %4 = math.rsqrt %3 : vector<1x8x1xf32>
    %cst_2 = arith.constant 5.000000e-01 : f32
    %5 = vector.broadcast %cst_2 : f32 to vector<1x8x1xf32>
    %6 = arith.mulf %5, %4 : vector<1x8x1xf32>
    %cst_3 = arith.constant 1.000000e+00 : f32
    %7 = vector.broadcast %cst_3 : f32 to vector<1x8x1xf32>
    %8 = arith.minimumf %6, %7 : vector<1x8x1xf32>
    %9 = vector.broadcast %8 : vector<1x8x1xf32> to vector<1x8x128xf32>
    %10 = arith.mulf %0, %9 : vector<1x8x128xf32>
    %c0_4 = arith.constant 0 : index
    %c0_5 = arith.constant 0 : index
    %c0_6 = arith.constant 0 : index
    %11 = vector.load %arg3[%c0_4, %c0_5, %c0_6] : memref<1x8x128xf32, #tpu.memory_space<vmem>>, vector<1x8x128xf32>
    tpu.vector_store %arg3[%c0_4, %c0_5, %c0_6], %10 {strides = array<i32>} : memref<1x8x128xf32, #tpu.memory_space<vmem>>, vector<1x8x128xf32>,
    return
  }
  func.func @transform_0(%arg0: i32, %arg1: i32) -> (i32, i32, i32) {
    %c0_i32 = arith.constant 0 : i32
    %c0_i32_0 = arith.constant 0 : i32
    return %arg0, %arg1, %c0_i32 : i32, i32, i32
  }
  func.func @transform_1(%arg0: i32, %arg1: i32) -> (i32, i32, i32) {
    %c0_i32 = arith.constant 0 : i32
    %c0_i32_0 = arith.constant 0 : i32
    return %arg0, %arg1, %c0_i32 : i32, i32, i32
  }
}

</mosaic_0001>

<llo_original>
// kernel: tpu_custom_call.1
$region0: #{tpu_custom_call.1}
  #allocation0 [shape = 'u32[]', space=smem, size = 0x4, offset = 0x4, fixed_abs, tag = 'smem constant byte address 0x4 - core index']
  #allocation1 [shape = 'u32[144,128]{1,0:T(1,128)}', space=vmem, size = 0x12000, scoped, tag = 'internal scratch']
  %s0 = inlined_call_operand.vmem [shape: f32[2,12,128], index: 0, kind: input, shape index: {}]
  %s1 = inlined_call_operand.vmem [shape: f32[2,12,128], index: 1, kind: output, shape index: {}]
  %s2 = sld [smem:[#allocation0]]
  $region37: #{tpu_custom_call.1} parent=0
    _
  %s4 = ssub.s32 1, %s2
  %s5 = scalar_select 0, %s4, %s2
  loop: start=0, step=1, limit=6
  $region2: #{tpu_custom_call.1} parent=0 // loop_pre_header
    _
  $region3: #{tpu_custom_call.1} parent=0 // loop_header
    %s7 = sphi 0, %s11
    %p8 = scmp.ge.s32.totalorder %s7, 6
    %s14 = sphi 0, %s26
    %s15 = sphi 0, %s22
    %s16 = sphi 0, %s14
    %s17 = sphi 0, %s15
    %s18 = sphi 0, %s16
    %s19 = sphi 0, %s17
    %s31 = sphi 0, %s33
    %s34 = sphi 0, %s31
    %s35 = sphi 0, %s34
    %s51 = sphi 0, %s35
    %s59 = sphi 0, %s61
    %s62 = sphi 0, %s59
    %s63 = sphi 0, %s62
    %s79 = sphi 0, %s63
  $region4: #{tpu_custom_call.1} parent=0 // loop_header_branch
    %10 = sbr.rel (%p8) target = $region8
  $region5: #{tpu_custom_call.1} parent=0 // loop_body
    %s12 = ssub.s32 %s7, 1
    %s13 = ssub.s32 %s7, 2
    %s20 = sadd.s32 1, %s15
    %p21 = scmp.ge.s32.totalorder %s20, 2
    %s22 = scalar_select %p21, 0, %s20
    %s23 = sadd.s32 1, %s14
    %s24 = scalar_select %p21, %s23, %s14
    %p25 = scmp.ge.s32.totalorder %s24, 2
    %s26 = scalar_select %p25, 0, %s24
    %s27 = ssub.s32 %s14, %s26
    %s28 = ssub.s32 %s15, %s22
    %s29 = sor.u32 %s27, %s28
    %p30 = scmp.eq.s32.totalorder %s29, 0
    %s32 = sadd.s32 %s31, 1
    %s33 = scalar_select %p30, %s31, %s32
    %p36 = pneg %p30
    %p37 = scmp.eq.s32.totalorder %s7, 3
    %p38 = por %p36, %p37
    %p39 = scmp.ne.s32.totalorder %s31, %s34
    %p40 = scmp.eq.s32.totalorder %s7, 0
    %p41 = por %p39, %p40
    %p42 = scmp.ne.s32.totalorder %s31, %s34
    %p43 = scmp.eq.s32.totalorder %s12, 3
    %p44 = por %p42, %p43
    %p45 = scmp.ne.s32.totalorder %s34, %s35
    %p46 = scmp.eq.s32.totalorder %s12, 0
    %p47 = por %p45, %p46
    %p48 = scmp.ne.s32.totalorder %s34, %s35
    %p49 = scmp.eq.s32.totalorder %s13, 3
    %p50 = por %p48, %p49
    %p52 = scmp.ne.s32.totalorder %s35, %s51
    %p53 = scmp.eq.s32.totalorder %s13, 0
    %p54 = por %p52, %p53
    %s55 = ssub.s32 %s14, %s26
    %s56 = ssub.s32 %s15, %s22
    %s57 = sor.u32 %s55, %s56
    %p58 = scmp.eq.s32.totalorder %s57, 0
    %s60 = sadd.s32 %s59, 1
    %s61 = scalar_select %p58, %s59, %s60
    %p64 = pneg %p58
    %p65 = scmp.eq.s32.totalorder %s7, 3
    %p66 = por %p64, %p65
    %p67 = scmp.ne.s32.totalorder %s59, %s62
    %p68 = scmp.eq.s32.totalorder %s7, 0
    %p69 = por %p67, %p68
    %p70 = scmp.ne.s32.totalorder %s59, %s62
    %p71 = scmp.eq.s32.totalorder %s12, 3
    %p72 = por %p70, %p71
    %p73 = scmp.ne.s32.totalorder %s62, %s63
    %p74 = scmp.eq.s32.totalorder %s12, 0
    %p75 = por %p73, %p74
    %p76 = scmp.ne.s32.totalorder %s62, %s63
    %p77 = scmp.eq.s32.totalorder %s13, 3
    %p78 = por %p76, %p77
    %p80 = scmp.ne.s32.totalorder %s63, %s79
    %p81 = scmp.eq.s32.totalorder %s13, 0
    %p82 = por %p80, %p81
    %p83 = scmp.le.s32.totalorder 1, %s7
    %p84 = scmp.lt.s32.totalorder %s7, 5
    %p85 = pnand %p83, %p84
    %p86 = pneg %p85
    // Predicated region
    $region9: #{tpu_custom_call.1} parent=5 // pred_check
      _
    $region10: #{tpu_custom_call.1} parent=5 // pred_check_branch
      %88 = sbr.rel (%p85) target = $region12
    $region11: #{tpu_custom_call.1} parent=5 // pred_region
      %s89 = ssub.s32 %s7, 1
    $region12: #{tpu_custom_call.1} parent=5 // pred_fallthru
      _
    %p90 = scmp.lt.s32.totalorder %s7, 4
    // Predicated region
    $region13: #{tpu_custom_call.1} parent=5 // pred_check
      %p91 = pneg %p90
    $region14: #{tpu_custom_call.1} parent=5 // pred_check_branch
      %93 = sbr.rel (%p91) target = $region16
    $region15: #{tpu_custom_call.1} parent=5 // pred_region
      // Predicated region
      $region17: #{tpu_custom_call.1} parent=15 // pred_check
        %p94 = pneg %p41
      $region18: #{tpu_custom_call.1} parent=15 // pred_check_branch
        %96 = sbr.rel (%p94) target = $region20
      $region19: #{tpu_custom_call.1} parent=15 // pred_region
        %p97 = scmp.lt.s32.totalorder %s14, 1
        %s98 = scalar_select %p97, %s14, 1
        %p99 = scmp.lt.s32.totalorder %s15, 1
        %s100 = scalar_select %p99, %s15, 1
        %s101 = smul.addr %s98, 2
        %s102 = sadd.s32 %s100, %s101
        %s103 = smul.addr %s102, 8
        %s104 = scalar_lea.vmem %s0, %s103
      $region20: #{tpu_custom_call.1} parent=15 // pred_fallthru
        _
    $region16: #{tpu_custom_call.1} parent=5 // pred_fallthru
      _
    %p105 = scmp.le.s32.totalorder 1, %s7
    %p106 = scmp.lt.s32.totalorder %s7, 5
    %p107 = pnand %p105, %p106
    %p108 = pneg %p107
    // Predicated region
    $region21: #{tpu_custom_call.1} parent=5 // pred_check
      _
    $region22: #{tpu_custom_call.1} parent=5 // pred_check_branch
      %110 = sbr.rel (%p107) target = $region24
    $region23: #{tpu_custom_call.1} parent=5 // pred_region
      %s111 = ssub.s32 %s7, 1
      %p112 = scmp.lt.s32.totalorder %s16, 1
      %s113 = scalar_select %p112, %s16, 1
      %p114 = scmp.lt.s32.totalorder %s17, 1
      %s115 = scalar_select %p114, %s17, 1
      %s116 = smul.addr %s113, 2
      %s117 = sadd.s32 %s115, %s116
      %s118 = smul.addr %s117, 8
      %s119 = scalar_lea.vmem %s0, %s118
      %p120 = pneg %p47
      %p121 = pneg %p44
      %p122 = pneg %p75
      %p123 = pneg %p72
      %p124 = scmp.lt.s32.totalorder %s16, 1
      %s125 = scalar_select %p124, %s16, 1
      %p126 = scmp.lt.s32.totalorder %s17, 1
      %s127 = scalar_select %p126, %s17, 1
      %s128 = smul.addr %s125, 2
      %s129 = sadd.s32 %s127, %s128
      %s130 = smul.addr %s129, 8
      %s131 = scalar_lea.vmem %s1, %s130
      %p132 = scmp.lt.s32.totalorder %s16, 1
      %s133 = scalar_select %p132, %s16, 1
      %p134 = scmp.lt.s32.totalorder %s17, 1
      %s135 = scalar_select %p134, %s17, 1
      %s136 = smul.addr %s133, 2
      %s137 = sadd.s32 %s135, %s136
      %s138 = smul.addr %s137, 8
      %s139 = scalar_lea.vmem %s0, %s138
      %p140 = scmp.lt.s32.totalorder %s16, 1
      %s141 = scalar_select %p140, %s16, 1
      %p142 = scmp.lt.s32.totalorder %s17, 1
      %s143 = scalar_select %p142, %s17, 1
      %s144 = smul.addr %s141, 2
      %s145 = sadd.s32 %s143, %s144
      %s146 = smul.addr %s145, 8
      %s147 = scalar_lea.vmem %s1, %s146
      %v148 = vld [vmem:[%s139] sm:$0xff]
      %v149 = vmul.f32 %v148, %v148
      %150 = vadd.xlane.f32.xlu0 %v149
      %v151 = vpop.xlane.xlu0 %150
      %v152 = vrsqrt.pop %v151
      %v153 = vmul.f32 %v152, 0.5
      %v154 = vmin.f32 %v153, 1.0
      %v155 = vmul.f32 %v148, %v154
      %156 = vst [vmem:[%s147] sm:$0xff] %v155
      %p157 = scmp.lt.s32.totalorder %s16, 1
      %s158 = scalar_select %p157, %s16, 1
      %p159 = scmp.lt.s32.totalorder %s17, 1
      %s160 = scalar_select %p159, %s17, 1
      %s161 = smul.addr %s158, 2
      %s162 = sadd.s32 %s160, %s161
      %s163 = smul.addr %s162, 8
      %s164 = scalar_lea.vmem %s1, %s163
      // Predicated region
      $region25: #{tpu_custom_call.1} parent=23 // pred_check
        %p165 = pneg %p72
      $region26: #{tpu_custom_call.1} parent=23 // pred_check_branch
        %167 = sbr.rel (%p165) target = $region28
      $region27: #{tpu_custom_call.1} parent=23 // pred_region
        _
      $region28: #{tpu_custom_call.1} parent=23 // pred_fallthru
        _
    $region24: #{tpu_custom_call.1} parent=5 // pred_fallthru
      _
    %p168 = scmp.le.s32.totalorder 2, %s7
    // Predicated region
    $region29: #{tpu_custom_call.1} parent=5 // pred_check
      %p169 = pneg %p168
    $region30: #{tpu_custom_call.1} parent=5 // pred_check_branch
      %171 = sbr.rel (%p169) target = $region32
    $region31: #{tpu_custom_call.1} parent=5 // pred_region
      %s172 = ssub.s32 %s7, 2
      // Predicated region
      $region33: #{tpu_custom_call.1} parent=31 // pred_check
        %p173 = pneg %p78
      $region34: #{tpu_custom_call.1} parent=31 // pred_check_branch
        %175 = sbr.rel (%p173) target = $region36
      $region35: #{tpu_custom_call.1} parent=31 // pred_region
        %p176 = scmp.lt.s32.totalorder %s18, 1
        %s177 = scalar_select %p176, %s18, 1
        %p178 = scmp.lt.s32.totalorder %s19, 1
        %s179 = scalar_select %p178, %s19, 1
        %s180 = smul.addr %s177, 2
        %s181 = sadd.s32 %s179, %s180
        %s182 = smul.addr %s181, 8
        %s183 = scalar_lea.vmem %s1, %s182
      $region36: #{tpu_custom_call.1} parent=31 // pred_fallthru
        _
    $region32: #{tpu_custom_call.1} parent=5 // pred_fallthru
      _
  $region6: #{tpu_custom_call.1} parent=0 // loop_footer
    %s11 = sadd.s32 1, %s7
  $region7: #{tpu_custom_call.1} parent=0 // loop_footer_branch
    %6 = sbr.rel target = $region3
  $region8: #{tpu_custom_call.1} parent=0 // loop_exit
    _

</llo_original>
